<compile_context>
chip_gen: v6e
topology: v6e:2x2x1
jax: 0.10.0
libtpu: 0.0.40
codegen_flags: <defaults>
</compile_context>

<pallas_src>
import math
import functools

import jax
import jax.numpy as jnp
from jax.experimental import pallas as pl
from jax.experimental.pallas import tpu as pltpu


# ---------------------------------------------------------------------------
# Kernel
# ---------------------------------------------------------------------------
def _hetero_attn_kernel(x_q_ref, x_kv_ref, wq_ref, bq_ref, wkv_ref, bkv_ref,
                        o_ref, q_scr, m_scr, l_scr, acc_scr, *,
                        num_heads, dpad, dv, compute_dtype, approx_recip):
    """Flash-style hetero self-attention.

    Grid: (batch, q_tile, kv_tile) with kv_tile innermost ("arbitrary").

    x_q_ref  : (1, tq, C)           f32   query rows (also the residual)
    x_kv_ref : (1, tk, C)           f32   key/value rows
    wq_ref   : (C, H*dpad)          compute_dtype   [per-head padded, *1/sqrt(dk)]
    bq_ref   : (1, H*dpad)          f32
    wkv_ref  : (C, H*dpad + C)      compute_dtype   [Wk padded | gamma*Wv]
    bkv_ref  : (1, H*dpad + C)      f32             [bk padded | gamma*bv]
    o_ref    : (1, tq, C)           f32
    q_scr    : (H, tq, dpad)        compute_dtype   query heads (per q tile)
    m_scr    : (H, tq, 1)           f32             running max
    l_scr    : (H, tq, 1)           f32             running softmax denom
    acc_scr  : (H, tq, dv)          f32             running output accumulator
    """
    H = num_heads
    j = pl.program_id(2)
    Hdp = H * dpad

    def split_heads(t, d):
        # (rows, H*d) -> (H, rows, d) via static lane slices + leading-axis
        # concat.  For q/k d == dpad (multiple of 128) so slices are
        # lane-aligned; for v d == dv (sub-128) -- a one-off per kv tile.
        return jnp.concatenate(
            [t[None, :, h * d:(h + 1) * d] for h in range(H)], axis=0)

    @pl.when(j == 0)
    def _init():
        # Q projection of this query tile (scale already folded into wq/bq);
        # computed once per (batch, q-tile) and kept in VMEM scratch.
        xq = x_q_ref[0].astype(compute_dtype)                        # (tq, C)
        q = jnp.dot(xq, wq_ref[...],
                    preferred_element_type=jnp.float32) + bq_ref[...]
        q_scr[...] = split_heads(q, dpad).astype(compute_dtype)      # (H, tq, dpad)
        m_scr[...] = jnp.full(m_scr.shape, -jnp.inf, jnp.float32)
        l_scr[...] = jnp.zeros(l_scr.shape, jnp.float32)
        acc_scr[...] = jnp.zeros(acc_scr.shape, jnp.float32)

    # Fused K/V projection of this KV tile: one wide MXU matmul
    # (gamma is folded into the V columns host-side).
    xkv = x_kv_ref[0].astype(compute_dtype)                          # (tk, C)
    kv = jnp.dot(xkv, wkv_ref[...],
                 preferred_element_type=jnp.float32) + bkv_ref[...]
    kh = split_heads(kv[:, :Hdp], dpad).astype(compute_dtype)        # (H, tk, dpad)
    vh = split_heads(kv[:, Hdp:], dv).astype(compute_dtype)          # (H, tk, dv)

    # Scores for all heads at once (zero-padded lanes contribute nothing);
    # LeakyReLU(0.2) applied BEFORE the softmax, as in the reference module.
    s = jnp.einsum('hqe,hke->hqk', q_scr[...], kh,
                   preferred_element_type=jnp.float32)               # (H, tq, tk)
    s = jnp.maximum(s, 0.2 * s)

    # Online (flash) softmax accumulation across KV tiles.
    m_prev = m_scr[...]
    m_new = jnp.maximum(m_prev, jnp.max(s, axis=-1, keepdims=True))
    alpha = jnp.exp(m_prev - m_new)
    p = jnp.exp(s - m_new)
    l_scr[...] = alpha * l_scr[...] + jnp.sum(p, axis=-1, keepdims=True)
    acc_scr[...] = alpha * acc_scr[...] + jnp.einsum(
        'hqk,hkd->hqd', p.astype(compute_dtype), vh,
        preferred_element_type=jnp.float32)                          # (H, tq, dv)
    m_scr[...] = m_new

    @pl.when(j == pl.num_programs(2) - 1)
    def _finalize():
        inv = pl.reciprocal(l_scr[...], approx=approx_recip)         # (H, tq, 1)
        o = acc_scr[...] * inv                                       # (H, tq, dv)
        # Reassemble heads into one lane-dense (tq, C) slab in-register and do
        # a SINGLE store fused with the residual add (att_drop has p=0 ->
        # identity; gamma is already folded into the V projection).
        o_slab = jnp.concatenate([o[h] for h in range(H)], axis=-1)  # (tq, C)
        o_ref[0] = (o_slab + x_q_ref[0]).astype(o_ref.dtype)


# ---------------------------------------------------------------------------
# Host-side helpers
# ---------------------------------------------------------------------------
def _pad_heads(w, num_heads, d, dpad):
    """(R, H*d) -> (R, H*dpad): zero-pad each head's columns to a lane-aligned width."""
    if d == dpad:
        return w
    rows = w.shape[0]
    w = w.reshape(rows, num_heads, d)
    w = jnp.pad(w, ((0, 0), (0, 0), (0, dpad - d)))
    return w.reshape(rows, num_heads * dpad)


def _pick_tile(m):
    for t in (256, 128):
        if m % t == 0:
            return t
    return m


def _vmem_budget_bytes():
    """Budget-first VMEM limit: ~75% of physical VMEM, capped at 100 MiB."""
    try:
        cap = pltpu.get_tpu_info().vmem_capacity_bytes
    except Exception:
        cap = 64 * 2**20          # conservative (v7x physical VMEM per core)
    return int(min(cap * 3 // 4, 100 * 2**20))


def hetero_self_attention(x, params, num_heads, *,
                          compute_dtype=jnp.bfloat16,
                          tile_q=None, tile_kv=None):
    """x: (B, M, C) float32. params: dict of weights. Returns (B, M, C)."""
    B, M, C = x.shape
    H = num_heads
    assert C % (4 * H) == 0, "hid_dim must be divisible by 4*num_heads"
    Ck = C // 8
    assert Ck % H == 0, "hid_dim must be divisible by 8*num_heads (per-head q/k dim)"

    dk = Ck // H                      # per-head q/k dim (tiny: C/(8H))
    dv = C // H                       # per-head v dim
    dpad = max(128, -(-dk // 128) * 128)   # lane-aligned per-head q/k width
    scale = 1.0 / math.sqrt(float(dk))
    f32 = jnp.float32

    tq = tile_q if tile_q is not None else _pick_tile(M)
    tk = tile_kv if tile_kv is not None else _pick_tile(M)
    assert M % tq == 0 and M % tk == 0, "tiles must divide M"

    gamma = params["gamma"].astype(f32)

    # Host-side weight prep: per-head lane padding (dk -> dpad), fold 1/sqrt(dk)
    # into the Q projection and gamma into the V projection; fuse K|V.
    wq = _pad_heads(params["Wq"] * scale, H, dk, dpad).astype(compute_dtype)
    bq = _pad_heads(params["bq"] * scale, H, dk, dpad).astype(f32)
    wk = _pad_heads(params["Wk"], H, dk, dpad)
    bk = _pad_heads(params["bk"], H, dk, dpad)
    wkv = jnp.concatenate([wk, params["Wv"] * gamma], axis=1).astype(compute_dtype)
    bkv = jnp.concatenate([bk, params["bv"] * gamma], axis=1).astype(f32)

    Hdp = H * dpad
    kv_cols = Hdp + C
    n_q, n_kv = M // tq, M // tk

    kernel = functools.partial(
        _hetero_attn_kernel, num_heads=H, dpad=dpad, dv=dv,
        compute_dtype=compute_dtype,
        approx_recip=(jnp.dtype(compute_dtype) == jnp.dtype(jnp.bfloat16)))

    return pl.pallas_call(
        kernel,
        out_shape=jax.ShapeDtypeStruct((B, M, C), x.dtype),
        grid_spec=pltpu.PrefetchScalarGridSpec(
            num_scalar_prefetch=0,
            grid=(B, n_q, n_kv),
            in_specs=[
                pl.BlockSpec((1, tq, C), lambda b, i, j: (b, i, 0)),   # x (query rows)
                pl.BlockSpec((1, tk, C), lambda b, i, j: (b, j, 0)),   # x (kv rows)
                pl.BlockSpec((C, Hdp), lambda b, i, j: (0, 0)),        # Wq (resident)
                pl.BlockSpec((1, Hdp), lambda b, i, j: (0, 0)),        # bq (resident)
                pl.BlockSpec((C, kv_cols), lambda b, i, j: (0, 0)),    # [Wk | g*Wv]
                pl.BlockSpec((1, kv_cols), lambda b, i, j: (0, 0)),    # [bk | g*bv]
            ],
            out_specs=pl.BlockSpec((1, tq, C), lambda b, i, j: (b, i, 0)),
            scratch_shapes=[
                pltpu.VMEM((H, tq, dpad), compute_dtype),  # q heads (per q tile)
                pltpu.VMEM((H, tq, 1), f32),               # running max
                pltpu.VMEM((H, tq, 1), f32),               # running denom
                pltpu.VMEM((H, tq, dv), f32),              # output accumulator
            ]),
        compiler_params=pltpu.CompilerParams(
            dimension_semantics=("parallel", "parallel", "arbitrary"),
            vmem_limit_bytes=_vmem_budget_bytes()),
    )(x, x, wq, bq, wkv, bkv)


# ---------------------------------------------------------------------------
# Parameters / reference
# ---------------------------------------------------------------------------
def init_params(key, hid_dim):
    """Deterministic xavier-uniform-style init (gain = sqrt(2), as in the module)."""
    C = hid_dim
    Ck = C // 8
    gain = math.sqrt(2.0)

    def xavier(k, in_dim, out_dim):
        std = gain * math.sqrt(2.0 / float(in_dim + out_dim))
        a = math.sqrt(3.0) * std
        return jax.random.uniform(k, (in_dim, out_dim), jnp.float32, -a, a)

    kq, kk, kv = jax.random.split(key, 3)
    return {
        "Wq": xavier(kq, C, Ck),
        "bq": jnp.zeros((1, Ck), jnp.float32),
        "Wk": xavier(kk, C, Ck),
        "bk": jnp.zeros((1, Ck), jnp.float32),
        "Wv": xavier(kv, C, C),
        "bv": jnp.zeros((1, C), jnp.float32),
        "gamma": jnp.zeros((1,), jnp.float32),   # nn.Parameter(torch.tensor([0.0]))
    }


def _reference(x, params, num_heads):
    """Pure-JAX reference of the PyTorch forward (for sanity checking)."""
    B, M, C = x.shape
    H = num_heads
    q = (x @ params["Wq"] + params["bq"]).reshape(B, M, H, -1).transpose(0, 2, 1, 3)
    k = (x @ params["Wk"] + params["bk"]).reshape(B, M, H, -1).transpose(0, 2, 3, 1)
    v = (x @ params["Wv"] + params["bv"]).reshape(B, M, H, -1).transpose(0, 2, 1, 3)
    s = (q @ k) / math.sqrt(q.shape[-1])
    s = jnp.where(s > 0, s, 0.2 * s)
    beta = jax.nn.softmax(s, axis=-1)
    out = params["gamma"] * (beta @ v)
    return out.transpose(0, 2, 1, 3).reshape(B, M, C) + x


# ---------------------------------------------------------------------------
# Demo / self-test
# ---------------------------------------------------------------------------
if __name__ == "__main__":
    # hid_dim must be divisible by 8 * num_heads (K/Q project to hid_dim // 8).
    B, M, C, H = 2, 8, 64, 2

    key = jax.random.PRNGKey(0)
    kx, kx2, kp = jax.random.split(key, 3)
    x = jax.random.normal(kx, (B, M, C), jnp.float32)
    params = init_params(kp, C)
    # non-zero gamma so the attention path actually contributes
    params["gamma"] = jnp.array([0.5], jnp.float32)

    ref = _reference(x, params, H)

    # Default path: bf16 MXU inputs, f32 accumulation / softmax stats.
    out = jax.block_until_ready(hetero_self_attention(x, params, H))
    assert out.shape == (B, M, C)
    assert jnp.allclose(out, ref, atol=5e-2, rtol=5e-2), "bf16 path mismatch vs reference"

    # f32 MXU path (exact reciprocal): tight tolerance.
    out_f32 = jax.block_until_ready(
        hetero_self_attention(x, params, H, compute_dtype=jnp.float32))
    assert jnp.allclose(out_f32, ref, atol=2e-3, rtol=2e-3), "f32 path mismatch vs reference"

    # Multi-tile flash path: query and KV tiles smaller than M exercise the
    # online-softmax accumulator across several kv grid steps.
    M2 = 16
    x2 = jax.random.normal(kx2, (B, M2, C), jnp.float32)
    ref2 = _reference(x2, params, H)
    out2 = jax.block_until_ready(
        hetero_self_attention(x2, params, H, compute_dtype=jnp.float32,
                              tile_q=8, tile_kv=8))
    assert jnp.allclose(out2, ref2, atol=2e-3, rtol=2e-3), "flash-tiled path mismatch"

    print("KERNEL_OK")
</pallas_src>

<mosaic_0001>
module attributes {stable_mosaic.version = 11 : i64} {
  func.func @_hetero_attn_kernel(%arg0: i32, %arg1: i32, %arg2: i32, %arg3: memref<1x8x64xf32, #tpu.memory_space<vmem>>, %arg4: memref<1x8x64xf32, #tpu.memory_space<vmem>>, %arg5: memref<64x256xbf16, #tpu.memory_space<vmem>>, %arg6: memref<1x256xf32, #tpu.memory_space<vmem>>, %arg7: memref<64x320xbf16, #tpu.memory_space<vmem>>, %arg8: memref<1x320xf32, #tpu.memory_space<vmem>>, %arg9: memref<1x8x64xf32, #tpu.memory_space<vmem>>, %arg10: memref<2x8x128xbf16, #tpu.memory_space<vmem>>, %arg11: memref<2x8x1xf32, #tpu.memory_space<vmem>>, %arg12: memref<2x8x1xf32, #tpu.memory_space<vmem>>, %arg13: memref<2x8x32xf32, #tpu.memory_space<vmem>>) attributes {dimension_semantics = [#tpu.dimension_semantics<parallel>, #tpu.dimension_semantics<parallel>, #tpu.dimension_semantics<arbitrary>], iteration_bounds = array<i64: 2, 1, 1>, scalar_prefetch = 0 : i64, scratch_operands = 4 : i64, tpu.core_type = #tpu.core_type<tc>, window_params = [{transform_indices = @transform_0, window_bounds = array<i64: 1, 8, 64>}, {transform_indices = @transform_1, window_bounds = array<i64: 1, 8, 64>}, {pipeline_mode = #tpu.pipeline_mode<synchronous>, transform_indices = @transform_2, window_bounds = array<i64: 64, 256>}, {pipeline_mode = #tpu.pipeline_mode<synchronous>, transform_indices = @transform_3, window_bounds = array<i64: 1, 256>}, {pipeline_mode = #tpu.pipeline_mode<synchronous>, transform_indices = @transform_4, window_bounds = array<i64: 64, 320>}, {pipeline_mode = #tpu.pipeline_mode<synchronous>, transform_indices = @transform_5, window_bounds = array<i64: 1, 320>}, {transform_indices = @transform_6, window_bounds = array<i64: 1, 8, 64>}]} {
    %c0_i32 = arith.constant 0 : i32
    %0 = arith.cmpi eq, %arg2, %c0_i32 : i32
    %1 = arith.extui %0 : i1 to i32
    %c0_i32_0 = arith.constant 0 : i32
    %2 = arith.cmpi ne, %1, %c0_i32_0 : i32
    scf.if %2 {
      %c0_35 = arith.constant 0 : index
      %c0_36 = arith.constant 0 : index
      %c0_37 = arith.constant 0 : index
      %56 = vector.load %arg3[%c0_35, %c0_36, %c0_37] : memref<1x8x64xf32, #tpu.memory_space<vmem>>, vector<1x8x64xf32>
      %57 = vector.shape_cast %56 : vector<1x8x64xf32> to vector<8x64xf32>
      %58 = arith.truncf %57 : vector<8x64xf32> to vector<8x64xbf16>
      %c0_38 = arith.constant 0 : index
      %c0_39 = arith.constant 0 : index
      %59 = vector.load %arg5[%c0_38, %c0_39] : memref<64x256xbf16, #tpu.memory_space<vmem>>, vector<64x256xbf16>
      %cst_40 = arith.constant dense<0.000000e+00> : vector<8x256xf32>
      %60 = tpu.matmul %58, %59, %cst_40 {dimension_numbers = #tpu.dot_dimension_numbers<[1], [0], [0], [1], [0, 0, 1, 1], [], []>} : vector<8x64xbf16>, vector<64x256xbf16>, vector<8x256xf32> -> vector<8x256xf32>
      %c0_41 = arith.constant 0 : index
      %c0_42 = arith.constant 0 : index
      %61 = vector.load %arg6[%c0_41, %c0_42] : memref<1x256xf32, #tpu.memory_space<vmem>>, vector<1x256xf32>
      %62 = vector.broadcast %61 : vector<1x256xf32> to vector<8x256xf32>
      %63 = arith.addf %60, %62 : vector<8x256xf32>
      %64 = vector.extract_strided_slice %63 {offsets = [0, 0], sizes = [8, 128], strides = [1, 1]} : vector<8x256xf32> to vector<8x128xf32>
      %65 = vector.shape_cast %64 : vector<8x128xf32> to vector<1x8x128xf32>
      %66 = vector.extract_strided_slice %63 {offsets = [0, 128], sizes = [8, 128], strides = [1, 1]} : vector<8x256xf32> to vector<8x128xf32>
      %67 = vector.shape_cast %66 : vector<8x128xf32> to vector<1x8x128xf32>
      %68 = tpu.concatenate %65, %67 in 0 : vector<1x8x128xf32>, vector<1x8x128xf32> -> vector<2x8x128xf32>
      %69 = arith.truncf %68 : vector<2x8x128xf32> to vector<2x8x128xbf16>
      %c0_43 = arith.constant 0 : index
      %c0_44 = arith.constant 0 : index
      %c0_45 = arith.constant 0 : index
      %70 = vector.load %arg10[%c0_43, %c0_44, %c0_45] : memref<2x8x128xbf16, #tpu.memory_space<vmem>>, vector<2x8x128xbf16>
      tpu.vector_store %arg10[%c0_43, %c0_44, %c0_45], %69 {strides = array<i32>} : memref<2x8x128xbf16, #tpu.memory_space<vmem>>, vector<2x8x128xbf16>,
      %cst_46 = arith.constant 0xFF800000 : f32
      %71 = vector.broadcast %cst_46 : f32 to vector<2x8x1xf32>
      %c0_47 = arith.constant 0 : index
      %c0_48 = arith.constant 0 : index
      %c0_49 = arith.constant 0 : index
      %72 = vector.load %arg11[%c0_47, %c0_48, %c0_49] : memref<2x8x1xf32, #tpu.memory_space<vmem>>, vector<2x8x1xf32>
      tpu.vector_store %arg11[%c0_47, %c0_48, %c0_49], %71 {strides = array<i32>} : memref<2x8x1xf32, #tpu.memory_space<vmem>>, vector<2x8x1xf32>,
      %cst_50 = arith.constant 0.000000e+00 : f32
      %73 = vector.broadcast %cst_50 : f32 to vector<2x8x1xf32>
      %c0_51 = arith.constant 0 : index
      %c0_52 = arith.constant 0 : index
      %c0_53 = arith.constant 0 : index
      %74 = vector.load %arg12[%c0_51, %c0_52, %c0_53] : memref<2x8x1xf32, #tpu.memory_space<vmem>>, vector<2x8x1xf32>
      tpu.vector_store %arg12[%c0_51, %c0_52, %c0_53], %73 {strides = array<i32>} : memref<2x8x1xf32, #tpu.memory_space<vmem>>, vector<2x8x1xf32>,
      %cst_54 = arith.constant 0.000000e+00 : f32
      %75 = vector.broadcast %cst_54 : f32 to vector<2x8x32xf32>
      %c0_55 = arith.constant 0 : index
      %c0_56 = arith.constant 0 : index
      %c0_57 = arith.constant 0 : index
      %76 = vector.load %arg13[%c0_55, %c0_56, %c0_57] : memref<2x8x32xf32, #tpu.memory_space<vmem>>, vector<2x8x32xf32>
      tpu.vector_store %arg13[%c0_55, %c0_56, %c0_57], %75 {strides = array<i32>} : memref<2x8x32xf32, #tpu.memory_space<vmem>>, vector<2x8x32xf32>,
    } else {
    }
    %c0 = arith.constant 0 : index
    %c0_1 = arith.constant 0 : index
    %c0_2 = arith.constant 0 : index
    %3 = vector.load %arg4[%c0, %c0_1, %c0_2] : memref<1x8x64xf32, #tpu.memory_space<vmem>>, vector<1x8x64xf32>
    %4 = vector.shape_cast %3 : vector<1x8x64xf32> to vector<8x64xf32>
    %5 = arith.truncf %4 : vector<8x64xf32> to vector<8x64xbf16>
    %c0_3 = arith.constant 0 : index
    %c0_4 = arith.constant 0 : index
    %6 = vector.load %arg7[%c0_3, %c0_4] : memref<64x320xbf16, #tpu.memory_space<vmem>>, vector<64x320xbf16>
    %cst = arith.constant dense<0.000000e+00> : vector<8x320xf32>
    %7 = tpu.matmul %5, %6, %cst {dimension_numbers = #tpu.dot_dimension_numbers<[1], [0], [0], [1], [0, 0, 1, 1], [], []>} : vector<8x64xbf16>, vector<64x320xbf16>, vector<8x320xf32> -> vector<8x320xf32>
    %c0_5 = arith.constant 0 : index
    %c0_6 = arith.constant 0 : index
    %8 = vector.load %arg8[%c0_5, %c0_6] : memref<1x320xf32, #tpu.memory_space<vmem>>, vector<1x320xf32>
    %9 = vector.broadcast %8 : vector<1x320xf32> to vector<8x320xf32>
    %10 = arith.addf %7, %9 : vector<8x320xf32>
    %11 = vector.extract_strided_slice %10 {offsets = [0, 0], sizes = [8, 256], strides = [1, 1]} : vector<8x320xf32> to vector<8x256xf32>
    %12 = vector.extract_strided_slice %11 {offsets = [0, 0], sizes = [8, 128], strides = [1, 1]} : vector<8x256xf32> to vector<8x128xf32>
    %13 = vector.shape_cast %12 : vector<8x128xf32> to vector<1x8x128xf32>
    %14 = vector.extract_strided_slice %11 {offsets = [0, 128], sizes = [8, 128], strides = [1, 1]} : vector<8x256xf32> to vector<8x128xf32>
    %15 = vector.shape_cast %14 : vector<8x128xf32> to vector<1x8x128xf32>
    %16 = tpu.concatenate %13, %15 in 0 : vector<1x8x128xf32>, vector<1x8x128xf32> -> vector<2x8x128xf32>
    %17 = arith.truncf %16 : vector<2x8x128xf32> to vector<2x8x128xbf16>
    %18 = vector.extract_strided_slice %10 {offsets = [0, 256], sizes = [8, 64], strides = [1, 1]} : vector<8x320xf32> to vector<8x64xf32>
    %19 = vector.extract_strided_slice %18 {offsets = [0, 0], sizes = [8, 32], strides = [1, 1]} : vector<8x64xf32> to vector<8x32xf32>
    %20 = vector.shape_cast %19 : vector<8x32xf32> to vector<1x8x32xf32>
    %21 = vector.extract_strided_slice %18 {offsets = [0, 32], sizes = [8, 32], strides = [1, 1]} : vector<8x64xf32> to vector<8x32xf32>
    %22 = vector.shape_cast %21 : vector<8x32xf32> to vector<1x8x32xf32>
    %23 = tpu.concatenate %20, %22 in 0 : vector<1x8x32xf32>, vector<1x8x32xf32> -> vector<2x8x32xf32>
    %24 = arith.truncf %23 : vector<2x8x32xf32> to vector<2x8x32xbf16>
    %c0_7 = arith.constant 0 : index
    %c0_8 = arith.constant 0 : index
    %c0_9 = arith.constant 0 : index
    %25 = vector.load %arg10[%c0_7, %c0_8, %c0_9] : memref<2x8x128xbf16, #tpu.memory_space<vmem>>, vector<2x8x128xbf16>
    "tpu.trace_start"() <{level = 10 : i32, message = "hqe,hke->hqk"}> : () -> ()
    %cst_10 = arith.constant dense<0.000000e+00> : vector<2x8x8xf32>
    %26 = tpu.matmul %25, %17, %cst_10 {dimension_numbers = #tpu.dot_dimension_numbers<[2], [2], [1], [1], [0, 0, 0, 1, 1, 1], [0], [0]>} : vector<2x8x128xbf16>, vector<2x8x128xbf16>, vector<2x8x8xf32> -> vector<2x8x8xf32>
    "tpu.trace_stop"() : () -> ()
    %cst_11 = arith.constant 2.000000e-01 : f32
    %27 = vector.broadcast %cst_11 : f32 to vector<2x8x8xf32>
    %28 = arith.mulf %27, %26 : vector<2x8x8xf32>
    %29 = arith.maximumf %26, %28 : vector<2x8x8xf32>
    %c0_12 = arith.constant 0 : index
    %c0_13 = arith.constant 0 : index
    %c0_14 = arith.constant 0 : index
    %30 = vector.load %arg11[%c0_12, %c0_13, %c0_14] : memref<2x8x1xf32, #tpu.memory_space<vmem>>, vector<2x8x1xf32>
    %cst_15 = arith.constant dense<0xFF800000> : vector<2x8xf32>
    %31 = vector.multi_reduction <maximumf>, %29, %cst_15 [2] : vector<2x8x8xf32> to vector<2x8xf32>
    %32 = vector.shape_cast %31 : vector<2x8xf32> to vector<2x8x1xf32>
    %33 = arith.maximumf %30, %32 : vector<2x8x1xf32>
    %34 = arith.subf %30, %33 : vector<2x8x1xf32>
    %35 = math.exp %34 : vector<2x8x1xf32>
    %36 = vector.broadcast %33 : vector<2x8x1xf32> to vector<2x8x8xf32>
    %37 = arith.subf %29, %36 : vector<2x8x8xf32>
    %38 = math.exp %37 : vector<2x8x8xf32>
    %c0_16 = arith.constant 0 : index
    %c0_17 = arith.constant 0 : index
    %c0_18 = arith.constant 0 : index
    %39 = vector.load %arg12[%c0_16, %c0_17, %c0_18] : memref<2x8x1xf32, #tpu.memory_space<vmem>>, vector<2x8x1xf32>
    %40 = arith.mulf %35, %39 : vector<2x8x1xf32>
    %cst_19 = arith.constant dense<0.000000e+00> : vector<2x8xf32>
    %41 = vector.multi_reduction <add>, %38, %cst_19 [2] : vector<2x8x8xf32> to vector<2x8xf32>
    %42 = vector.shape_cast %41 : vector<2x8xf32> to vector<2x8x1xf32>
    %43 = arith.addf %40, %42 : vector<2x8x1xf32>
    %c0_20 = arith.constant 0 : index
    %c0_21 = arith.constant 0 : index
    %c0_22 = arith.constant 0 : index
    %44 = vector.load %arg12[%c0_20, %c0_21, %c0_22] : memref<2x8x1xf32, #tpu.memory_space<vmem>>, vector<2x8x1xf32>
    tpu.vector_store %arg12[%c0_20, %c0_21, %c0_22], %43 {strides = array<i32>} : memref<2x8x1xf32, #tpu.memory_space<vmem>>, vector<2x8x1xf32>,
    %c0_23 = arith.constant 0 : index
    %c0_24 = arith.constant 0 : index
    %c0_25 = arith.constant 0 : index
    %45 = vector.load %arg13[%c0_23, %c0_24, %c0_25] : memref<2x8x32xf32, #tpu.memory_space<vmem>>, vector<2x8x32xf32>
    %46 = vector.broadcast %35 : vector<2x8x1xf32> to vector<2x8x32xf32>
    %47 = arith.mulf %46, %45 : vector<2x8x32xf32>
    %48 = arith.truncf %38 : vector<2x8x8xf32> to vector<2x8x8xbf16>
    "tpu.trace_start"() <{level = 10 : i32, message = "hqk,hkd->hqd"}> : () -> ()
    %cst_26 = arith.constant dense<0.000000e+00> : vector<2x8x32xf32>
    %49 = tpu.matmul %48, %24, %cst_26 {dimension_numbers = #tpu.dot_dimension_numbers<[2], [1], [1], [2], [0, 0, 0, 1, 1, 2], [0], [0]>} : vector<2x8x8xbf16>, vector<2x8x32xbf16>, vector<2x8x32xf32> -> vector<2x8x32xf32>
    "tpu.trace_stop"() : () -> ()
    %50 = arith.addf %47, %49 : vector<2x8x32xf32>
    %c0_27 = arith.constant 0 : index
    %c0_28 = arith.constant 0 : index
    %c0_29 = arith.constant 0 : index
    %51 = vector.load %arg13[%c0_27, %c0_28, %c0_29] : memref<2x8x32xf32, #tpu.memory_space<vmem>>, vector<2x8x32xf32>
    tpu.vector_store %arg13[%c0_27, %c0_28, %c0_29], %50 {strides = array<i32>} : memref<2x8x32xf32, #tpu.memory_space<vmem>>, vector<2x8x32xf32>,
    %c0_30 = arith.constant 0 : index
    %c0_31 = arith.constant 0 : index
    %c0_32 = arith.constant 0 : index
    %52 = vector.load %arg11[%c0_30, %c0_31, %c0_32] : memref<2x8x1xf32, #tpu.memory_space<vmem>>, vector<2x8x1xf32>
    tpu.vector_store %arg11[%c0_30, %c0_31, %c0_32], %33 {strides = array<i32>} : memref<2x8x1xf32, #tpu.memory_space<vmem>>, vector<2x8x1xf32>,
    %c0_i32_33 = arith.constant 0 : i32
    %53 = arith.cmpi eq, %arg2, %c0_i32_33 : i32
    %54 = arith.extui %53 : i1 to i32
    %c0_i32_34 = arith.constant 0 : i32
    %55 = arith.cmpi ne, %54, %c0_i32_34 : i32
    scf.if %55 {
      %c0_35 = arith.constant 0 : index
      %c0_36 = arith.constant 0 : index
      %c0_37 = arith.constant 0 : index
      %56 = vector.load %arg12[%c0_35, %c0_36, %c0_37] : memref<2x8x1xf32, #tpu.memory_space<vmem>>, vector<2x8x1xf32>
      %57 = tpu.reciprocal %56 {approx = true} : vector<2x8x1xf32> -> vector<2x8x1xf32>
      %c0_38 = arith.constant 0 : index
      %c0_39 = arith.constant 0 : index
      %c0_40 = arith.constant 0 : index
      %58 = vector.load %arg13[%c0_38, %c0_39, %c0_40] : memref<2x8x32xf32, #tpu.memory_space<vmem>>, vector<2x8x32xf32>
      %59 = vector.broadcast %57 : vector<2x8x1xf32> to vector<2x8x32xf32>
      %60 = arith.mulf %58, %59 : vector<2x8x32xf32>
      %61 = vector.extract_strided_slice %60 {offsets = [0, 0, 0], sizes = [1, 8, 32], strides = [1, 1, 1]} : vector<2x8x32xf32> to vector<1x8x32xf32>
      %62 = vector.shape_cast %61 : vector<1x8x32xf32> to vector<8x32xf32>
      %63 = vector.extract_strided_slice %60 {offsets = [1, 0, 0], sizes = [1, 8, 32], strides = [1, 1, 1]} : vector<2x8x32xf32> to vector<1x8x32xf32>
      %64 = vector.shape_cast %63 : vector<1x8x32xf32> to vector<8x32xf32>
      %65 = tpu.concatenate %62, %64 in 1 : vector<8x32xf32>, vector<8x32xf32> -> vector<8x64xf32>
      %c0_41 = arith.constant 0 : index
      %c0_42 = arith.constant 0 : index
      %c0_43 = arith.constant 0 : index
      %66 = vector.load %arg3[%c0_41, %c0_42, %c0_43] : memref<1x8x64xf32, #tpu.memory_space<vmem>>, vector<1x8x64xf32>
      %67 = vector.shape_cast %66 : vector<1x8x64xf32> to vector<8x64xf32>
      %68 = arith.addf %65, %67 : vector<8x64xf32>
      %c0_44 = arith.constant 0 : index
      %c0_45 = arith.constant 0 : index
      %c0_46 = arith.constant 0 : index
      %69 = vector.load %arg9[%c0_44, %c0_45, %c0_46] : memref<1x8x64xf32, #tpu.memory_space<vmem>>, vector<1x8x64xf32>
      %70 = vector.shape_cast %69 : vector<1x8x64xf32> to vector<8x64xf32>
      %71 = vector.shape_cast %68 : vector<8x64xf32> to vector<1x8x64xf32>
      tpu.vector_store %arg9[%c0_44, %c0_45, %c0_46], %71 {strides = array<i32>} : memref<1x8x64xf32, #tpu.memory_space<vmem>>, vector<1x8x64xf32>,
    } else {
    }
    return
  }
  func.func @transform_0(%arg0: i32, %arg1: i32, %arg2: i32) -> (i32, i32, i32) {
    %c0_i32 = arith.constant 0 : i32
    %c0_i32_0 = arith.constant 0 : i32
    return %arg0, %arg1, %c0_i32 : i32, i32, i32
  }
  func.func @transform_1(%arg0: i32, %arg1: i32, %arg2: i32) -> (i32, i32, i32) {
    %c0_i32 = arith.constant 0 : i32
    %c0_i32_0 = arith.constant 0 : i32
    return %arg0, %arg2, %c0_i32 : i32, i32, i32
  }
  func.func @transform_2(%arg0: i32, %arg1: i32, %arg2: i32) -> (i32, i32) {
    %c0_i32 = arith.constant 0 : i32
    %c0_i32_0 = arith.constant 0 : i32
    %c0_i32_1 = arith.constant 0 : i32
    return %c0_i32, %c0_i32_0 : i32, i32
  }
  func.func @transform_3(%arg0: i32, %arg1: i32, %arg2: i32) -> (i32, i32) {
    %c0_i32 = arith.constant 0 : i32
    %c0_i32_0 = arith.constant 0 : i32
    %c0_i32_1 = arith.constant 0 : i32
    return %c0_i32, %c0_i32_0 : i32, i32
  }
  func.func @transform_4(%arg0: i32, %arg1: i32, %arg2: i32) -> (i32, i32) {
    %c0_i32 = arith.constant 0 : i32
    %c0_i32_0 = arith.constant 0 : i32
    %c0_i32_1 = arith.constant 0 : i32
    return %c0_i32, %c0_i32_0 : i32, i32
  }
  func.func @transform_5(%arg0: i32, %arg1: i32, %arg2: i32) -> (i32, i32) {
    %c0_i32 = arith.constant 0 : i32
    %c0_i32_0 = arith.constant 0 : i32
    %c0_i32_1 = arith.constant 0 : i32
    return %c0_i32, %c0_i32_0 : i32, i32
  }
  func.func @transform_6(%arg0: i32, %arg1: i32, %arg2: i32) -> (i32, i32, i32) {
    %c0_i32 = arith.constant 0 : i32
    %c0_i32_0 = arith.constant 0 : i32
    return %arg0, %arg1, %c0_i32 : i32, i32, i32
  }
}

</mosaic_0001>

<llo_original>
// kernel: tpu_custom_call.1
$region0: #{tpu_custom_call.1}
  #allocation0 [shape = 'u32[]', space=smem, size = 0x4, offset = 0x4, fixed_abs, tag = 'smem constant byte address 0x4 - core index']
  #allocation1 [shape = 'u32[144,128]{1,0:T(1,128)}', space=vmem, size = 0x12000, scoped, tag = 'internal scratch']
  #allocation2 [shape = 'bf16[2,8,128]{2,1,0:T(8,128)(2,1)}', space=vmem, size = 0x1000, scoped, tag = 'scratch operand']
  #allocation3 [shape = 'f32[2,8,1]{2,1,0:T(8,128)}', space=vmem, size = 0x2000, scoped, tag = 'scratch operand']
  #allocation4 [shape = 'f32[2,8,1]{2,1,0:T(8,128)}', space=vmem, size = 0x2000, scoped, tag = 'scratch operand']
  #allocation5 [shape = 'f32[2,8,32]{2,1,0:T(8,128)}', space=vmem, size = 0x2000, scoped, tag = 'scratch operand']
  %s0 = inlined_call_operand.hbm [shape: f32[2,8,64], index: 0, kind: input, shape index: {}]
  %s1 = inlined_call_operand.hbm [shape: f32[2,8,64], index: 1, kind: input, shape index: {}]
  %s2 = inlined_call_operand.hbm [shape: bf16[64,256], index: 2, kind: input, shape index: {}]
  %s3 = inlined_call_operand.vmem [shape: f32[1,256], index: 3, kind: input, shape index: {}]
  %s4 = inlined_call_operand.hbm [shape: bf16[64,320], index: 4, kind: input, shape index: {}]
  %s5 = inlined_call_operand.vmem [shape: f32[1,320], index: 5, kind: input, shape index: {}]
  %s6 = inlined_call_operand.hbm [shape: f32[2,8,64], index: 6, kind: output, shape index: {}]
  %s7 = sld [smem:[#allocation0]]
  $region81: #{tpu_custom_call.1} parent=0
    _
  %s9 = ssub.s32 1, %s7
  %s10 = scalar_select 0, %s9, %s7
  $region1: #{tpu_custom_call.1} parent=0
    #allocation6 [shape = 'u8[8192]{0}', space=vmem, size = 0x2000, scoped, tag = 'input window, operand 0']
    #allocation7 [shape = 's32[2]{0}', space=sflag, size = 0x8, scoped, tag = 'scoped memory for tpu_custom_call.1']
    #allocation8 [shape = 's32[2]{0}', space=sflag, size = 0x8, scoped, tag = 'scoped memory for tpu_custom_call.1']
    #allocation9 [shape = 'u8[8192]{0}', space=vmem, size = 0x2000, scoped, tag = 'input window, operand 1']
    #allocation10 [shape = 's32[2]{0}', space=sflag, size = 0x8, scoped, tag = 'scoped memory for tpu_custom_call.1']
    #allocation11 [shape = 'u8[32768]{0}', space=vmem, size = 0x8000, scoped, tag = 'input window, operand 2, single buffered']
    #allocation12 [shape = 'u8[49152]{0}', space=vmem, size = 0xc000, scoped, tag = 'input window, operand 4, single buffered']
    #allocation13 [shape = 's32[1]{0}', space=sflag, size = 0x4, scoped, tag = 'scoped memory for tpu_custom_call.1']
    #allocation14 [shape = 'u8[8192]{0}', space=vmem, size = 0x2000, scoped, tag = 'output window, operand 0']
    %11 = vsyncpa [#allocation7], 0
    %s12 = scalar_lea.sflag [#allocation7], 1
    %13 = vsyncpa %s12, 0
    %14 = vsyncpa [#allocation10], 0
    %s15 = scalar_lea.sflag [#allocation10], 1
    %16 = vsyncpa %s15, 0
    %17 = vsyncpa [#allocation13], 0
    %18 = vsyncpa [#allocation8], 0
    %s19 = scalar_lea.sflag [#allocation8], 1
    %20 = vsyncpa %s19, 0
    loop: start=0, step=1, limit=4
    $region2: #{tpu_custom_call.1} parent=1 // loop_pre_header
      _
    $region3: #{tpu_custom_call.1} parent=1 // loop_header
      %s22 = sphi 0, %s26
      %p23 = scmp.ge.s32.totalorder %s22, 4
      %s29 = sphi 0, %s48
      %s30 = sphi 0, %s44
      %s31 = sphi 0, %s40
      %s32 = sphi 0, %s29
      %s33 = sphi 0, %s30
      %s34 = sphi 0, %s31
      %s35 = sphi 0, %s32
      %s36 = sphi 0, %s33
      %s37 = sphi 0, %s34
      %s53 = sphi 0, %s55
      %s56 = sphi 0, %s53
      %s57 = sphi 0, %s56
      %s73 = sphi 0, %s57
      %s81 = sphi 0, %s83
      %s84 = sphi 0, %s81
      %s85 = sphi 0, %s84
      %s101 = sphi 0, %s85
      %s105 = sphi 0, %s105
      %s107 = sphi 0, %s105
      %s108 = sphi 0, %s107
      %s122 = sphi 0, %s108
      %s126 = sphi 0, %s126
      %s128 = sphi 0, %s126
      %s129 = sphi 0, %s128
      %s143 = sphi 0, %s129
      %s147 = sphi 0, %s147
      %s149 = sphi 0, %s147
      %s150 = sphi 0, %s149
      %s164 = sphi 0, %s150
      %s168 = sphi 0, %s168
      %s170 = sphi 0, %s168
      %s171 = sphi 0, %s170
      %s185 = sphi 0, %s171
      %s193 = sphi 0, %s195
      %s196 = sphi 0, %s193
      %s197 = sphi 0, %s196
      %s213 = sphi 0, %s197
    $region4: #{tpu_custom_call.1} parent=1 // loop_header_branch
      %25 = sbr.rel (%p23) target = $region8
    $region5: #{tpu_custom_call.1} parent=1 // loop_body
      %s27 = ssub.s32 %s22, 1
      %s28 = ssub.s32 %s22, 2
      %s38 = sadd.s32 1, %s31
      %p39 = scmp.ge.s32.totalorder %s38, 1
      %s40 = scalar_select %p39, 0, %s38
      %s41 = sadd.s32 1, %s30
      %s42 = scalar_select %p39, %s41, %s30
      %p43 = scmp.ge.s32.totalorder %s42, 1
      %s44 = scalar_select %p43, 0, %s42
      %s45 = sadd.s32 1, %s29
      %s46 = scalar_select %p43, %s45, %s29
      %p47 = scmp.ge.s32.totalorder %s46, 2
      %s48 = scalar_select %p47, 0, %s46
      %s49 = ssub.s32 %s29, %s48
      %s50 = ssub.s32 %s30, %s44
      %s51 = sor.u32 %s49, %s50
      %p52 = scmp.eq.s32.totalorder %s51, 0
      %s54 = sadd.s32 %s53, 1
      %s55 = scalar_select %p52, %s53, %s54
      %p58 = pneg %p52
      %p59 = scmp.eq.s32.totalorder %s22, 1
      %p60 = por %p58, %p59
      %p61 = scmp.ne.s32.totalorder %s53, %s56
      %p62 = scmp.eq.s32.totalorder %s22, 0
      %p63 = por %p61, %p62
      %p64 = scmp.ne.s32.totalorder %s53, %s56
      %p65 = scmp.eq.s32.totalorder %s27, 1
      %p66 = por %p64, %p65
      %p67 = scmp.ne.s32.totalorder %s56, %s57
      %p68 = scmp.eq.s32.totalorder %s27, 0
      %p69 = por %p67, %p68
      %p70 = scmp.ne.s32.totalorder %s56, %s57
      %p71 = scmp.eq.s32.totalorder %s28, 1
      %p72 = por %p70, %p71
      %p74 = scmp.ne.s32.totalorder %s57, %s73
      %p75 = scmp.eq.s32.totalorder %s28, 0
      %p76 = por %p74, %p75
      %s77 = ssub.s32 %s29, %s48
      %s78 = ssub.s32 %s31, %s40
      %s79 = sor.u32 %s77, %s78
      %p80 = scmp.eq.s32.totalorder %s79, 0
      %s82 = sadd.s32 %s81, 1
      %s83 = scalar_select %p80, %s81, %s82
      %p86 = pneg %p80
      %p87 = scmp.eq.s32.totalorder %s22, 1
      %p88 = por %p86, %p87
      %p89 = scmp.ne.s32.totalorder %s81, %s84
      %p90 = scmp.eq.s32.totalorder %s22, 0
      %p91 = por %p89, %p90
      %p92 = scmp.ne.s32.totalorder %s81, %s84
      %p93 = scmp.eq.s32.totalorder %s27, 1
      %p94 = por %p92, %p93
      %p95 = scmp.ne.s32.totalorder %s84, %s85
      %p96 = scmp.eq.s32.totalorder %s27, 0
      %p97 = por %p95, %p96
      %p98 = scmp.ne.s32.totalorder %s84, %s85
      %p99 = scmp.eq.s32.totalorder %s28, 1
      %p100 = por %p98, %p99
      %p102 = scmp.ne.s32.totalorder %s85, %s101
      %p103 = scmp.eq.s32.totalorder %s28, 0
      %p104 = por %p102, %p103
      %s106 = sadd.s32 %s105, 1
      %p109 = scmp.eq.s32.totalorder %s22, 1
      %p110 = scmp.ne.s32.totalorder %s105, %s107
      %p111 = scmp.eq.s32.totalorder %s22, 0
      %p112 = por %p110, %p111
      %p113 = scmp.ne.s32.totalorder %s105, %s107
      %p114 = scmp.eq.s32.totalorder %s27, 1
      %p115 = por %p113, %p114
      %p116 = scmp.ne.s32.totalorder %s107, %s108
      %p117 = scmp.eq.s32.totalorder %s27, 0
      %p118 = por %p116, %p117
      %p119 = scmp.ne.s32.totalorder %s107, %s108
      %p120 = scmp.eq.s32.totalorder %s28, 1
      %p121 = por %p119, %p120
      %p123 = scmp.ne.s32.totalorder %s108, %s122
      %p124 = scmp.eq.s32.totalorder %s28, 0
      %p125 = por %p123, %p124
      %s127 = sadd.s32 %s126, 1
      %p130 = scmp.eq.s32.totalorder %s22, 1
      %p131 = scmp.ne.s32.totalorder %s126, %s128
      %p132 = scmp.eq.s32.totalorder %s22, 0
      %p133 = por %p131, %p132
      %p134 = scmp.ne.s32.totalorder %s126, %s128
      %p135 = scmp.eq.s32.totalorder %s27, 1
      %p136 = por %p134, %p135
      %p137 = scmp.ne.s32.totalorder %s128, %s129
      %p138 = scmp.eq.s32.totalorder %s27, 0
      %p139 = por %p137, %p138
      %p140 = scmp.ne.s32.totalorder %s128, %s129
      %p141 = scmp.eq.s32.totalorder %s28, 1
      %p142 = por %p140, %p141
      %p144 = scmp.ne.s32.totalorder %s129, %s143
      %p145 = scmp.eq.s32.totalorder %s28, 0
      %p146 = por %p144, %p145
      %s148 = sadd.s32 %s147, 1
      %p151 = scmp.eq.s32.totalorder %s22, 1
      %p152 = scmp.ne.s32.totalorder %s147, %s149
      %p153 = scmp.eq.s32.totalorder %s22, 0
      %p154 = por %p152, %p153
      %p155 = scmp.ne.s32.totalorder %s147, %s149
      %p156 = scmp.eq.s32.totalorder %s27, 1
      %p157 = por %p155, %p156
      %p158 = scmp.ne.s32.totalorder %s149, %s150
      %p159 = scmp.eq.s32.totalorder %s27, 0
      %p160 = por %p158, %p159
      %p161 = scmp.ne.s32.totalorder %s149, %s150
      %p162 = scmp.eq.s32.totalorder %s28, 1
      %p163 = por %p161, %p162
      %p165 = scmp.ne.s32.totalorder %s150, %s164
      %p166 = scmp.eq.s32.totalorder %s28, 0
      %p167 = por %p165, %p166
      %s169 = sadd.s32 %s168, 1
      %p172 = scmp.eq.s32.totalorder %s22, 1
      %p173 = scmp.ne.s32.totalorder %s168, %s170
      %p174 = scmp.eq.s32.totalorder %s22, 0
      %p175 = por %p173, %p174
      %p176 = scmp.ne.s32.totalorder %s168, %s170
      %p177 = scmp.eq.s32.totalorder %s27, 1
      %p178 = por %p176, %p177
      %p179 = scmp.ne.s32.totalorder %s170, %s171
      %p180 = scmp.eq.s32.totalorder %s27, 0
      %p181 = por %p179, %p180
      %p182 = scmp.ne.s32.totalorder %s170, %s171
      %p183 = scmp.eq.s32.totalorder %s28, 1
      %p184 = por %p182, %p183
      %p186 = scmp.ne.s32.totalorder %s171, %s185
      %p187 = scmp.eq.s32.totalorder %s28, 0
      %p188 = por %p186, %p187
      %s189 = ssub.s32 %s29, %s48
      %s190 = ssub.s32 %s30, %s44
      %s191 = sor.u32 %s189, %s190
      %p192 = scmp.eq.s32.totalorder %s191, 0
      %s194 = sadd.s32 %s193, 1
      %s195 = scalar_select %p192, %s193, %s194
      %p198 = pneg %p192
      %p199 = scmp.eq.s32.totalorder %s22, 1
      %p200 = por %p198, %p199
      %p201 = scmp.ne.s32.totalorder %s193, %s196
      %p202 = scmp.eq.s32.totalorder %s22, 0
      %p203 = por %p201, %p202
      %p204 = scmp.ne.s32.totalorder %s193, %s196
      %p205 = scmp.eq.s32.totalorder %s27, 1
      %p206 = por %p204, %p205
      %p207 = scmp.ne.s32.totalorder %s196, %s197
      %p208 = scmp.eq.s32.totalorder %s27, 0
      %p209 = por %p207, %p208
      %p210 = scmp.ne.s32.totalorder %s196, %s197
      %p211 = scmp.eq.s32.totalorder %s28, 1
      %p212 = por %p210, %p211
      %p214 = scmp.ne.s32.totalorder %s197, %s213
      %p215 = scmp.eq.s32.totalorder %s28, 0
      %p216 = por %p214, %p215
      %p217 = scmp.le.s32.totalorder 1, %s22
      %p218 = scmp.lt.s32.totalorder %s22, 3
      %p219 = pnand %p217, %p218
      %p220 = pneg %p219
      // Predicated region
      $region9: #{tpu_custom_call.1} parent=5 // pred_check
        _
      $region10: #{tpu_custom_call.1} parent=5 // pred_check_branch
        %222 = sbr.rel (%p219) target = $region12
      $region11: #{tpu_custom_call.1} parent=5 // pred_region
        %s223 = ssub.s32 %s22, 1
        // Predicated region
        $region13: #{tpu_custom_call.1} parent=11 // pred_check
          %p224 = pneg %p118
        $region14: #{tpu_custom_call.1} parent=11 // pred_check_branch
          %226 = sbr.rel (%p224) target = $region16
        $region15: #{tpu_custom_call.1} parent=11 // pred_region
          %s228 = ssub.s32 1024, 1024
          %229 = vsyncadd [#allocation10], %s228
          %s230 = sshll.u32 [#allocation11], 4
          %s231 = int_to_ptr.vmem [resolvable:$true] %s230
          %236 = dma.hbm_to_vmem [thread:$0]  %s2, 1024, %s231, [#allocation10], 128, 128, 8
        $region16: #{tpu_custom_call.1} parent=11 // pred_fallthru
          _
        // Predicated region
        $region17: #{tpu_custom_call.1} parent=11 // pred_check
          %p237 = pneg %p139
        $region18: #{tpu_custom_call.1} parent=11 // pred_check_branch
          %239 = sbr.rel (%p237) target = $region20
        $region19: #{tpu_custom_call.1} parent=11 // pred_region
          _
        $region20: #{tpu_custom_call.1} parent=11 // pred_fallthru
          _
        // Predicated region
        $region21: #{tpu_custom_call.1} parent=11 // pred_check
          %p240 = pneg %p160
        $region22: #{tpu_custom_call.1} parent=11 // pred_check_branch
          %242 = sbr.rel (%p240) target = $region24
        $region23: #{tpu_custom_call.1} parent=11 // pred_region
          %s244 = ssub.s32 1536, 1536
          %245 = vsyncadd [#allocation13], %s244
          %s246 = sshll.u32 [#allocation12], 4
          %s247 = int_to_ptr.vmem [resolvable:$true] %s246
          %252 = dma.hbm_to_vmem [thread:$0]  %s4, 1536, %s247, [#allocation13], 192, 192, 12
        $region24: #{tpu_custom_call.1} parent=11 // pred_fallthru
          _
        // Predicated region
        $region25: #{tpu_custom_call.1} parent=11 // pred_check
          %p253 = pneg %p181
        $region26: #{tpu_custom_call.1} parent=11 // pred_check_branch
          %255 = sbr.rel (%p253) target = $region28
        $region27: #{tpu_custom_call.1} parent=11 // pred_region
          _
        $region28: #{tpu_custom_call.1} parent=11 // pred_fallthru
          _
      $region12: #{tpu_custom_call.1} parent=5 // pred_fallthru
        _
      %p256 = scmp.lt.s32.totalorder %s22, 2
      // Predicated region
      $region29: #{tpu_custom_call.1} parent=5 // pred_check
        %p257 = pneg %p256
      $region30: #{tpu_custom_call.1} parent=5 // pred_check_branch
        %259 = sbr.rel (%p257) target = $region32
      $region31: #{tpu_custom_call.1} parent=5 // pred_region
        // Predicated region
        $region33: #{tpu_custom_call.1} parent=31 // pred_check
          %p260 = pneg %p63
        $region34: #{tpu_custom_call.1} parent=31 // pred_check_branch
          %262 = sbr.rel (%p260) target = $region36
        $region35: #{tpu_custom_call.1} parent=31 // pred_region
          %s263 = sand.u32 %s53, 1
          %s264 = scalar_lea.sflag [#allocation7], %s263
          %s265 = sand.u32 %s53, 1
          %s266 = smul.addr %s265, 8
          %s267 = scalar_lea.vmem [#allocation6], %s266
          %s269 = ssub.s32 128, 128
          %270 = vsyncadd %s264, %s269
          %s271 = sadd.s32 %s30, %s29
          %s272 = smul.addr %s271, 128
          %s273 = scalar_lea.hbm %s0, %s272
          %s275 = sshll.u32 %s267, 4
          %s276 = int_to_ptr.vmem [resolvable:$true] %s275
          %278 = dma.hbm_to_vmem [thread:$0]  %s273, 128, %s276, %s264
        $region36: #{tpu_custom_call.1} parent=31 // pred_fallthru
          _
        // Predicated region
        $region37: #{tpu_custom_call.1} parent=31 // pred_check
          %p279 = pneg %p91
        $region38: #{tpu_custom_call.1} parent=31 // pred_check_branch
          %281 = sbr.rel (%p279) target = $region40
        $region39: #{tpu_custom_call.1} parent=31 // pred_region
          %s282 = sand.u32 %s22, 1
          %s283 = scalar_lea.sflag [#allocation10], %s282
          %s284 = sand.u32 %s81, 1
          %s285 = smul.addr %s284, 8
          %s286 = scalar_lea.vmem [#allocation9], %s285
          %s288 = ssub.s32 128, 128
          %289 = vsyncadd %s283, %s288
          %s290 = sadd.s32 %s31, %s29
          %s291 = smul.addr %s290, 128
          %s292 = scalar_lea.hbm %s1, %s291
          %s294 = sshll.u32 %s286, 4
          %s295 = int_to_ptr.vmem [resolvable:$true] %s294
          %297 = dma.hbm_to_vmem [thread:$0]  %s292, 128, %s295, %s283
        $region40: #{tpu_custom_call.1} parent=31 // pred_fallthru
          _
      $region32: #{tpu_custom_call.1} parent=5 // pred_fallthru
        _
      %p298 = scmp.le.s32.totalorder 1, %s22
      %p299 = scmp.lt.s32.totalorder %s22, 3
      %p300 = pnand %p298, %p299
      %p301 = pneg %p300
      // Predicated region
      $region41: #{tpu_custom_call.1} parent=5 // pred_check
        _
      $region42: #{tpu_custom_call.1} parent=5 // pred_check_branch
        %303 = sbr.rel (%p300) target = $region44
      $region43: #{tpu_custom_call.1} parent=5 // pred_region
        %s304 = ssub.s32 %s22, 1
        %s305 = sand.u32 %s56, 1
        %s306 = scalar_lea.sflag [#allocation7], %s305
        %s307 = sand.u32 %s56, 1
        %s308 = smul.addr %s307, 8
        %s309 = scalar_lea.vmem [#allocation6], %s308
        // Predicated region
        $region45: #{tpu_custom_call.1} parent=43 // pred_check
          %p310 = pneg %p69
        $region46: #{tpu_custom_call.1} parent=43 // pred_check_branch
          %312 = sbr.rel (%p310) target = $region48
        $region47: #{tpu_custom_call.1} parent=43 // pred_region
          %313 = dma.done %s306, 128
        $region48: #{tpu_custom_call.1} parent=43 // pred_fallthru
          _
        %s314 = sand.u32 %s27, 1
        %s315 = scalar_lea.sflag [#allocation10], %s314
        %s316 = sand.u32 %s84, 1
        %s317 = smul.addr %s316, 8
        %s318 = scalar_lea.vmem [#allocation9], %s317
        // Predicated region
        $region49: #{tpu_custom_call.1} parent=43 // pred_check
          %p319 = pneg %p97
        $region50: #{tpu_custom_call.1} parent=43 // pred_check_branch
          %321 = sbr.rel (%p319) target = $region52
        $region51: #{tpu_custom_call.1} parent=43 // pred_region
          %322 = dma.done %s315, 128
        $region52: #{tpu_custom_call.1} parent=43 // pred_fallthru
          _
        // Predicated region
        $region53: #{tpu_custom_call.1} parent=43 // pred_check
          %p323 = pneg %p118
        $region54: #{tpu_custom_call.1} parent=43 // pred_check_branch
          %325 = sbr.rel (%p323) target = $region56
        $region55: #{tpu_custom_call.1} parent=43 // pred_region
          %326 = dma.done [#allocation10], 1024
        $region56: #{tpu_custom_call.1} parent=43 // pred_fallthru
          _
        // Predicated region
        $region57: #{tpu_custom_call.1} parent=43 // pred_check
          %p327 = pneg %p160
        $region58: #{tpu_custom_call.1} parent=43 // pred_check_branch
          %329 = sbr.rel (%p327) target = $region60
        $region59: #{tpu_custom_call.1} parent=43 // pred_region
          %330 = dma.done [#allocation13], 1536
        $region60: #{tpu_custom_call.1} parent=43 // pred_fallthru
          _
        %s331 = sand.u32 %s56, 1
        %s332 = scalar_lea.sflag [#allocation7], %s331
        %s333 = sand.u32 %s56, 1
        %s334 = smul.addr %s333, 8
        %s335 = scalar_lea.vmem [#allocation6], %s334
        %p336 = pneg %p69
        %p337 = pneg %p66
        %s338 = sand.u32 %s27, 1
        %s339 = scalar_lea.sflag [#allocation10], %s338
        %s340 = sand.u32 %s84, 1
        %s341 = smul.addr %s340, 8
        %s342 = scalar_lea.vmem [#allocation9], %s341
        %p343 = pneg %p97
        %p344 = pneg %p94
        %p345 = pneg %p118
        %p346 = pneg %p115
        %p347 = pneg %p139
        %p348 = pneg %p136
        %p349 = pneg %p160
        %p350 = pneg %p157
        %p351 = pneg %p181
        %p352 = pneg %p178
        %p353 = pneg %p209
        %p354 = pneg %p206
        %s355 = sand.u32 %s196, 1
        %s356 = scalar_lea.sflag [#allocation8], %s355
        %s357 = sand.u32 %s196, 1
        %s358 = smul.addr %s357, 8
        %s359 = scalar_lea.vmem [#allocation14], %s358
        %p361 = scmp.eq.s32.totalorder %s34, 0
        // Predicated region
        $region61: #{tpu_custom_call.1} parent=43 // pred_check
          %p362 = pneg %p361
        $region62: #{tpu_custom_call.1} parent=43 // pred_check_branch
          %364 = sbr.rel (%p362) target = $region64
        $region63: #{tpu_custom_call.1} parent=43 // pred_region
          %v365 = vld [vmem:[%s309] sm:$0xff]
          %v366 = vpack.c.bf16 %v365, %v365
          %v367 = vld [vmem:[#allocation11] sm:$0xff]
          %v368 = vld [vmem:[#allocation11 + $0x8] sm:$0xff]
          %v369 = vld [vmem:[#allocation11 + $0x10] sm:$0xff]
          %v370 = vld [vmem:[#allocation11 + $0x18] sm:$0xff]
          %v371 = vld [vmem:[#allocation11 + $0x20] sm:$0xff]
          %v372 = vld [vmem:[#allocation11 + $0x28] sm:$0xff]
          %v373 = vld [vmem:[#allocation11 + $0x30] sm:$0xff]
          %v374 = vld [vmem:[#allocation11 + $0x38] sm:$0xff]
          %v375 = vld [vmem:[%s3] sm:$0x3]
          %v377 = vlaneseq
          %v378 = vshrl.u32 %v377, 7
          %v379 = vsub.s32 0, %v378
          %v380 = vrot.slane %v375, %v379
          %v381 = vlaneseq
          %v382 = vshrl.u32 %v381, 7
          %v383 = vsub.s32 1, %v382
          %v384 = vrot.slane %v375, %v383
          %v395 = vunpack.c.l.b16 %v367
          %v396 = vunpack.c.h.b16 %v367
          %v397 = vunpack.c.l.b16 %v368
          %v398 = vunpack.c.h.b16 %v368
          %v399 = vunpack.c.l.b16 %v369
          %v400 = vunpack.c.h.b16 %v369
          %v401 = vunpack.c.l.b16 %v370
          %v402 = vunpack.c.h.b16 %v370
          %v403 = vunpack.c.l.b16 %v371
          %v404 = vunpack.c.h.b16 %v371
          %v405 = vunpack.c.l.b16 %v372
          %v406 = vunpack.c.h.b16 %v372
          %v407 = vunpack.c.l.b16 %v373
          %v408 = vunpack.c.h.b16 %v373
          %v409 = vunpack.c.l.b16 %v374
          %v410 = vunpack.c.h.b16 %v374
          %v411 = vpack.c.b16 %v397, %v395
          %v412 = vpack.c.b16 %v398, %v396
          %v413 = vpack.c.b16 %v401, %v399
          %v414 = vpack.c.b16 %v402, %v400
          %v415 = vpack.c.b16 %v405, %v403
          %v416 = vpack.c.b16 %v406, %v404
          %v417 = vpack.c.b16 %v409, %v407
          %v418 = vpack.c.b16 %v410, %v408
          %vm427 = vcmask 523264
          %v429 = vsel %vm427, %v366, 0
          %431 = vmatprep.subr.bf16.mxu0 0
          %432 = vmatpush1.bf16.msra.mxu0 0
          %433 = vmatprep.subr.bf16.mxu0 0
          %434 = vmatpush1.bf16.msra.mxu0 0
          %435 = vmatprep.subr.bf16.mxu0 0
          %436 = vmatpush1.bf16.msra.mxu0 0
          %437 = vmatprep.subr.bf16.mxu0 0
          %438 = vmatpush1.bf16.msra.mxu0 0
          %439 = vmatprep.subr.bf16.mxu0 %v418
          %440 = vmatpush1.bf16.msra.mxu0 %v417
          %441 = vmatprep.subr.bf16.mxu0 %v416
          %442 = vmatpush1.bf16.msra.mxu0 %v415
          %443 = vmatprep.subr.bf16.mxu0 %v414
          %444 = vmatpush1.bf16.msra.mxu0 %v413
          %445 = vmatprep.subr.bf16.mxu0 %v412
          %446 = vmatpush1.bf16.msra.mxu0 %v411
          %447 = vmatprep.subr.bf16.mxu0 0
          %448 = vmatpush2.bf16.msra.mxu0 0
          %449 = vmatprep.subr.bf16.mxu0 0
          %450 = vmatpush2.bf16.msra.mxu0 0
          %451 = vmatprep.subr.bf16.mxu0 0
          %452 = vmatpush2.bf16.msra.mxu0 0
          %453 = vmatprep.subr.bf16.mxu0 0
          %454 = vmatpush2.bf16.msra.mxu0 0
          %455 = vmatprep.subr.bf16.mxu0 0
          %456 = vmatpush2.bf16.msra.mxu0 0
          %457 = vmatprep.subr.bf16.mxu0 0
          %458 = vmatpush2.bf16.msra.mxu0 0
          %459 = vmatprep.subr.bf16.mxu0 0
          %460 = vmatpush2.bf16.msra.mxu0 0
          %461 = vmatprep.subr.bf16.mxu0 0
          %462 = vmatpush2.bf16.msra.mxu0 0
          %463 = vmatprep.mubr.bf16.mxu0 0
          %464 = vmatmul.mubr.bf16.gmra.mxu0 %v429
          %v465 = vpop.f32.mrf.mxu0
          %v466 = vadd.f32 %v380, %v465
          %v467 = vpop.f32.mrf.mxu0
          %v468 = vadd.f32 %v384, %v467
          %v469 = vpop.f32.mrf.mxu0
          %v470 = vpop.f32.mrf.mxu0
          %471 = vdwg.mxu0
          %v472 = vpack.c.bf16 %v466, %v466
          %v473 = vpack.c.bf16 %v468, %v468
          %474 = vst [vmem:[#allocation2] sm:$0xf] %v472
          %475 = vst [vmem:[#allocation2 + $0x4] sm:$0xf] %v473
          %vm476 = vcmask 7168
          %477 = vst.msk [vmem:[#allocation3] sm:$0xff] %vm476, -inf
          %478 = vst.msk [vmem:[#allocation3 + $0x8] sm:$0xff] %vm476, -inf
          %479 = vst.msk [vmem:[#allocation4] sm:$0xff] %vm476, 0.0
          %480 = vst.msk [vmem:[#allocation4 + $0x8] sm:$0xff] %vm476, 0.0
          %vm481 = vcmask 261120
          %482 = vst.msk [vmem:[#allocation5] sm:$0xff] %vm481, 0.0
          %483 = vst.msk [vmem:[#allocation5 + $0x8] sm:$0xff] %vm481, 0.0
        $region64: #{tpu_custom_call.1} parent=43 // pred_fallthru
          _
        %v484 = vld [vmem:[%s318] sm:$0xff]
        %v485 = vpack.c.bf16 %v484, %v484
        %v486 = vld [vmem:[#allocation12] sm:$0xff]
        %v487 = vld [vmem:[#allocation12 + $0x8] sm:$0xf]
        %v488 = vld [vmem:[#allocation12 + $0xc] sm:$0xff]
        %v489 = vld [vmem:[#allocation12 + $0x14] sm:$0xf]
        %v490 = vld [vmem:[#allocation12 + $0x18] sm:$0xff]
        %v491 = vld [vmem:[#allocation12 + $0x20] sm:$0xf]
        %v492 = vld [vmem:[#allocation12 + $0x24] sm:$0xff]
        %v493 = vld [vmem:[#allocation12 + $0x2c] sm:$0xf]
        %v494 = vld [vmem:[#allocation12 + $0x30] sm:$0xff]
        %v495 = vld [vmem:[#allocation12 + $0x38] sm:$0xf]
        %v496 = vld [vmem:[#allocation12 + $0x3c] sm:$0xff]
        %v497 = vld [vmem:[#allocation12 + $0x44] sm:$0xf]
        %v498 = vld [vmem:[#allocation12 + $0x48] sm:$0xff]
        %v499 = vld [vmem:[#allocation12 + $0x50] sm:$0xf]
        %v500 = vld [vmem:[#allocation12 + $0x54] sm:$0xff]
        %v501 = vld [vmem:[#allocation12 + $0x5c] sm:$0xf]
        %v502 = vld [vmem:[%s5] sm:$0x7]
        %v504 = vlaneseq
        %v505 = vshrl.u32 %v504, 7
        %v506 = vsub.s32 0, %v505
        %v507 = vrot.slane %v502, %v506
        %v508 = vlaneseq
        %v509 = vshrl.u32 %v508, 7
        %v510 = vsub.s32 1, %v509
        %v511 = vrot.slane %v502, %v510
        %v512 = vlaneseq
        %v513 = vshrl.u32 %v512, 7
        %v514 = vsub.s32 2, %v513
        %v515 = vrot.slane %v502, %v514
        %v535 = vunpack.c.l.b16 %v486
        %v536 = vunpack.c.h.b16 %v486
        %v537 = vunpack.c.l.b16 %v487
        %v538 = vunpack.c.l.b16 %v488
        %v539 = vunpack.c.h.b16 %v488
        %v540 = vunpack.c.l.b16 %v489
        %v541 = vunpack.c.l.b16 %v490
        %v542 = vunpack.c.h.b16 %v490
        %v543 = vunpack.c.l.b16 %v491
        %v544 = vunpack.c.l.b16 %v492
        %v545 = vunpack.c.h.b16 %v492
        %v546 = vunpack.c.l.b16 %v493
        %v547 = vunpack.c.l.b16 %v494
        %v548 = vunpack.c.h.b16 %v494
        %v549 = vunpack.c.l.b16 %v495
        %v550 = vunpack.c.l.b16 %v496
        %v551 = vunpack.c.h.b16 %v496
        %v552 = vunpack.c.l.b16 %v497
        %v553 = vunpack.c.l.b16 %v498
        %v554 = vunpack.c.h.b16 %v498
        %v555 = vunpack.c.l.b16 %v499
        %v556 = vunpack.c.l.b16 %v500
        %v557 = vunpack.c.h.b16 %v500
        %v558 = vunpack.c.l.b16 %v501
        %v559 = vpack.c.b16 %v538, %v535
        %v560 = vpack.c.b16 %v539, %v536
        %v561 = vpack.c.b16 %v540, %v537
        %v562 = vpack.c.b16 %v544, %v541
        %v563 = vpack.c.b16 %v545, %v542
        %v564 = vpack.c.b16 %v546, %v543
        %v565 = vpack.c.b16 %v550, %v547
        %v566 = vpack.c.b16 %v551, %v548
        %v567 = vpack.c.b16 %v552, %v549
        %v568 = vpack.c.b16 %v556, %v553
        %v569 = vpack.c.b16 %v557, %v554
        %v570 = vpack.c.b16 %v558, %v555
        %vm583 = vcmask 523264
        %v585 = vsel %vm583, %v485, 0
        %587 = vmatprep.subr.bf16.mxu0 0
        %588 = vmatpush1.bf16.msra.mxu0 0
        %589 = vmatprep.subr.bf16.mxu0 0
        %590 = vmatpush1.bf16.msra.mxu0 0
        %591 = vmatprep.subr.bf16.mxu0 0
        %592 = vmatpush1.bf16.msra.mxu0 0
        %593 = vmatprep.subr.bf16.mxu0 0
        %594 = vmatpush1.bf16.msra.mxu0 0
        %595 = vmatprep.subr.bf16.mxu0 %v569
        %596 = vmatpush1.bf16.msra.mxu0 %v568
        %597 = vmatprep.subr.bf16.mxu0 %v566
        %598 = vmatpush1.bf16.msra.mxu0 %v565
        %599 = vmatprep.subr.bf16.mxu0 %v563
        %600 = vmatpush1.bf16.msra.mxu0 %v562
        %601 = vmatprep.subr.bf16.mxu0 %v560
        %602 = vmatpush1.bf16.msra.mxu0 %v559
        %603 = vmatprep.subr.bf16.mxu0 0
        %604 = vmatpush2.bf16.msra.mxu0 0
        %605 = vmatprep.subr.bf16.mxu0 0
        %606 = vmatpush2.bf16.msra.mxu0 0
        %607 = vmatprep.subr.bf16.mxu0 0
        %608 = vmatpush2.bf16.msra.mxu0 0
        %609 = vmatprep.subr.bf16.mxu0 0
        %610 = vmatpush2.bf16.msra.mxu0 0
        %611 = vmatprep.subr.bf16.mxu0 0
        %612 = vmatpush2.bf16.msra.mxu0 0
        %613 = vmatprep.subr.bf16.mxu0 0
        %614 = vmatpush2.bf16.msra.mxu0 0
        %615 = vmatprep.subr.bf16.mxu0 0
        %616 = vmatpush2.bf16.msra.mxu0 0
        %617 = vmatprep.subr.bf16.mxu0 0
        %618 = vmatpush2.bf16.msra.mxu0 0
        %619 = vmatprep.mubr.bf16.mxu0 0
        %620 = vmatmul.mubr.bf16.gmra.mxu0 %v585
        %v621 = vpop.f32.mrf.mxu0
        %v622 = vadd.f32 %v507, %v621
        %v623 = vpop.f32.mrf.mxu0
        %v624 = vadd.f32 %v511, %v623
        %v625 = vpop.f32.mrf.mxu0
        %v626 = vpop.f32.mrf.mxu0
        %627 = vdwg.mxu0
        %628 = vmatprep.subr.bf16.mxu0 0
        %629 = vmatpush1.bf16.msra.mxu0 0
        %630 = vmatprep.subr.bf16.mxu0 0
        %631 = vmatpush1.bf16.msra.mxu0 0
        %632 = vmatprep.subr.bf16.mxu0 0
        %633 = vmatpush1.bf16.msra.mxu0 0
        %634 = vmatprep.subr.bf16.mxu0 0
        %635 = vmatpush1.bf16.msra.mxu0 0
        %636 = vmatprep.subr.bf16.mxu0 0
        %637 = vmatpush1.bf16.msra.mxu0 %v570
        %638 = vmatprep.subr.bf16.mxu0 0
        %639 = vmatpush1.bf16.msra.mxu0 %v567
        %640 = vmatprep.subr.bf16.mxu0 0
        %641 = vmatpush1.bf16.msra.mxu0 %v564
        %642 = vmatprep.subr.bf16.mxu0 0
        %643 = vmatpush1.bf16.msra.mxu0 %v561
        %644 = vmatprep.subr.bf16.mxu0 0
        %645 = vmatpush2.bf16.msra.mxu0 0
        %646 = vmatprep.subr.bf16.mxu0 0
        %647 = vmatpush2.bf16.msra.mxu0 0
        %648 = vmatprep.subr.bf16.mxu0 0
        %649 = vmatpush2.bf16.msra.mxu0 0
        %650 = vmatprep.subr.bf16.mxu0 0
        %651 = vmatpush2.bf16.msra.mxu0 0
        %652 = vmatprep.subr.bf16.mxu0 0
        %653 = vmatpush2.bf16.msra.mxu0 0
        %654 = vmatprep.subr.bf16.mxu0 0
        %655 = vmatpush2.bf16.msra.mxu0 0
        %656 = vmatprep.subr.bf16.mxu0 0
        %657 = vmatpush2.bf16.msra.mxu0 0
        %658 = vmatprep.subr.bf16.mxu0 0
        %659 = vmatpush2.bf16.msra.mxu0 0
        %660 = vmatprep.mubr.bf16.mxu0 0
        %661 = vmatmul.mubr.bf16.gmra.mxu0 %v585
        %v662 = vpop.f32.mrf.mxu0
        %v663 = vadd.f32 %v515, %v662
        %v664 = vpop.f32.mrf.mxu0
        %v665 = vpop.f32.mrf.mxu0
        %v666 = vpop.f32.mrf.mxu0
        %667 = vdwg.mxu0
        %v668 = vpack.c.bf16 %v622, %v622
        %v669 = vpack.c.bf16 %v624, %v624
        %671 = vrot.lane.b32.xlu0 %v663, 96
        %v672 = vpop.permute.xlu0 %671
        %v674 = vpack.c.bf16 %v663, %v663
        %v675 = vpack.c.bf16 %v672, %v672
        %v676 = vld [vmem:[#allocation2] sm:$0xf]
        %v677 = vld [vmem:[#allocation2 + $0x4] sm:$0xf]
        %678 = vmatprep.subr.bf16.mxu0 0
        %679 = vmatpush1.bf16.xpose.msra.mxu0 0
        %680 = vmatprep.subr.bf16.mxu0 0
        %681 = vmatpush1.bf16.xpose.msra.mxu0 0
        %682 = vmatprep.subr.bf16.mxu0 0
        %683 = vmatpush1.bf16.xpose.msra.mxu0 0
        %684 = vmatprep.subr.bf16.mxu0 0
        %685 = vmatpush1.bf16.xpose.msra.mxu0 0
        %686 = vmatprep.subr.bf16.mxu0 0
        %687 = vmatpush1.bf16.xpose.msra.mxu0 0
        %688 = vmatprep.subr.bf16.mxu0 0
        %689 = vmatpush1.bf16.xpose.msra.mxu0 0
        %690 = vmatprep.subr.bf16.mxu0 0
        %691 = vmatpush1.bf16.xpose.msra.mxu0 0
        %692 = vmatprep.subr.bf16.mxu0 0
        %693 = vmatpush1.bf16.xpose.msra.mxu0 %v668
        %694 = vmatprep.subr.bf16.mxu0 0
        %695 = vmatpush2.bf16.xpose.msra.mxu0 0
        %696 = vmatprep.subr.bf16.mxu0 0
        %697 = vmatpush2.bf16.xpose.msra.mxu0 0
        %698 = vmatprep.subr.bf16.mxu0 0
        %699 = vmatpush2.bf16.xpose.msra.mxu0 0
        %700 = vmatprep.subr.bf16.mxu0 0
        %701 = vmatpush2.bf16.xpose.msra.mxu0 0
        %702 = vmatprep.subr.bf16.mxu0 0
        %703 = vmatpush2.bf16.xpose.msra.mxu0 0
        %704 = vmatprep.subr.bf16.mxu0 0
        %705 = vmatpush2.bf16.xpose.msra.mxu0 0
        %706 = vmatprep.subr.bf16.mxu0 0
        %707 = vmatpush2.bf16.xpose.msra.mxu0 0
        %708 = vmatprep.subr.bf16.mxu0 0
        %709 = vmatpush2.bf16.xpose.msra.mxu0 0
        %710 = vmatprep.mubr.bf16.mxu0 0
        %711 = vmatmul.mubr.bf16.gmra.mxu0 %v676
        %v712 = vpop.f32.mrf.mxu0
        %v713 = vadd.f32 0.0, %v712
        %v714 = vpop.f32.mrf.mxu0
        %v715 = vpop.f32.mrf.mxu0
        %v716 = vpop.f32.mrf.mxu0
        %717 = vdwg.mxu0
        %718 = vmatprep.subr.bf16.mxu0 0
        %719 = vmatpush1.bf16.xpose.msra.mxu0 0
        %720 = vmatprep.subr.bf16.mxu0 0
        %721 = vmatpush1.bf16.xpose.msra.mxu0 0
        %722 = vmatprep.subr.bf16.mxu0 0
        %723 = vmatpush1.bf16.xpose.msra.mxu0 0
        %724 = vmatprep.subr.bf16.mxu0 0
        %725 = vmatpush1.bf16.xpose.msra.mxu0 0
        %726 = vmatprep.subr.bf16.mxu0 0
        %727 = vmatpush1.bf16.xpose.msra.mxu0 0
        %728 = vmatprep.subr.bf16.mxu0 0
        %729 = vmatpush1.bf16.xpose.msra.mxu0 0
        %730 = vmatprep.subr.bf16.mxu0 0
        %731 = vmatpush1.bf16.xpose.msra.mxu0 0
        %732 = vmatprep.subr.bf16.mxu0 0
        %733 = vmatpush1.bf16.xpose.msra.mxu0 %v669
        %734 = vmatprep.subr.bf16.mxu0 0
        %735 = vmatpush2.bf16.xpose.msra.mxu0 0
        %736 = vmatprep.subr.bf16.mxu0 0
        %737 = vmatpush2.bf16.xpose.msra.mxu0 0
        %738 = vmatprep.subr.bf16.mxu0 0
        %739 = vmatpush2.bf16.xpose.msra.mxu0 0
        %740 = vmatprep.subr.bf16.mxu0 0
        %741 = vmatpush2.bf16.xpose.msra.mxu0 0
        %742 = vmatprep.subr.bf16.mxu0 0
        %743 = vmatpush2.bf16.xpose.msra.mxu0 0
        %744 = vmatprep.subr.bf16.mxu0 0
        %745 = vmatpush2.bf16.xpose.msra.mxu0 0
        %746 = vmatprep.subr.bf16.mxu0 0
        %747 = vmatpush2.bf16.xpose.msra.mxu0 0
        %748 = vmatprep.subr.bf16.mxu0 0
        %749 = vmatpush2.bf16.xpose.msra.mxu0 0
        %750 = vmatprep.mubr.bf16.mxu0 0
        %751 = vmatmul.mubr.bf16.gmra.mxu0 %v677
        %v752 = vpop.f32.mrf.mxu0
        %v753 = vadd.f32 0.0, %v752
        %v754 = vpop.f32.mrf.mxu0
        %v755 = vpop.f32.mrf.mxu0
        %v756 = vpop.f32.mrf.mxu0
        %757 = vdwg.mxu0
        %v758 = vmul.f32 %v713, 0.2
        %v759 = vmul.f32 %v753, 0.2
        %v760 = vmax.f32 %v713, %v758
        %v761 = vmax.f32 %v753, %v759
        %v762 = vld [vmem:[#allocation3] sm:$0xff]
        %v763 = vld [vmem:[#allocation3 + $0x8] sm:$0xff]
        %vm764 = vcmask 64512
        %v765 = vsel %vm764, %v760, -inf
        %766 = vmax.xlane.f32.xlu0 %v765
        %v767 = vpop.xlane.xlu0 %766
        %v768 = vsel %vm764, %v761, -inf
        %769 = vmax.xlane.f32.xlu0 %v768
        %v770 = vpop.xlane.xlu0 %769
        %v771 = vmax.f32 %v762, %v767
        %v772 = vmax.f32 %v763, %v770
        %v773 = vsub.f32 %v762, %v771
        %v774 = vsub.f32 %v763, %v772
        %v775 = vmul.f32 %v773, 1.442695
        %v776 = vpow.pop %v775
        %v777 = vmul.f32 %v774, 1.442695
        %v778 = vpow.pop %v777
        %780 = vset.pattern.permute.xlu0 0
        %781 = vperm.xlu0 %780, %v771
        %v782 = vpop.permute.xlu0 %781
        %785 = vset.pattern.permute.xlu0 0
        %786 = vperm.xlu0 %785, %v772
        %v787 = vpop.permute.xlu0 %786
        %v789 = vsub.f32 %v760, %v782
        %v790 = vsub.f32 %v761, %v787
        %v791 = vmul.f32 %v789, 1.442695
        %v792 = vpow.pop %v791
        %v793 = vmul.f32 %v790, 1.442695
        %v794 = vpow.pop %v793
        %v795 = vld [vmem:[#allocation4] sm:$0xff]
        %v796 = vld [vmem:[#allocation4 + $0x8] sm:$0xff]
        %v797 = vmul.f32 %v776, %v795
        %v798 = vmul.f32 %v778, %v796
        %v799 = vsel %vm764, %v792, 0.0
        %800 = vadd.xlane.f32.xlu0 %v799
        %v801 = vpop.xlane.xlu0 %800
        %v802 = vsel %vm764, %v794, 0.0
        %803 = vadd.xlane.f32.xlu0 %v802
        %v804 = vpop.xlane.xlu0 %803
        %v805 = vadd.f32 %v797, %v801
        %v806 = vadd.f32 %v798, %v804
        %vm807 = vcmask 7168
        %808 = vst.msk [vmem:[#allocation4] sm:$0xff] %vm807, %v805
        %809 = vst.msk [vmem:[#allocation4 + $0x8] sm:$0xff] %vm807, %v806
        %v810 = vld [vmem:[#allocation5] sm:$0xff]
        %v811 = vld [vmem:[#allocation5 + $0x8] sm:$0xff]
        %813 = vset.pattern.permute.xlu0 0
        %814 = vperm.xlu0 %813, %v776
        %v815 = vpop.permute.xlu0 %814
        %818 = vset.pattern.permute.xlu0 0
        %819 = vperm.xlu0 %818, %v778
        %v820 = vpop.permute.xlu0 %819
        %v822 = vmul.f32 %v815, %v810
        %v823 = vmul.f32 %v820, %v811
        %v824 = vpack.c.bf16 %v792, %v792
        %v825 = vpack.c.bf16 %v794, %v794
        %v827 = vsel %vm764, %v824, 0
        %vm829 = vcmask 1043456
        %v831 = vsel %vm829, %v674, 0
        %833 = vmatprep.subr.bf16.mxu0 0
        %834 = vmatpush1.bf16.msra.mxu0 0
        %835 = vmatprep.subr.bf16.mxu0 0
        %836 = vmatpush1.bf16.msra.mxu0 0
        %837 = vmatprep.subr.bf16.mxu0 0
        %838 = vmatpush1.bf16.msra.mxu0 0
        %839 = vmatprep.subr.bf16.mxu0 0
        %840 = vmatpush1.bf16.msra.mxu0 0
        %841 = vmatprep.subr.bf16.mxu0 0
        %842 = vmatpush1.bf16.msra.mxu0 0
        %843 = vmatprep.subr.bf16.mxu0 0
        %844 = vmatpush1.bf16.msra.mxu0 0
        %845 = vmatprep.subr.bf16.mxu0 0
        %846 = vmatpush1.bf16.msra.mxu0 0
        %847 = vmatprep.subr.bf16.mxu0 0
        %848 = vmatpush1.bf16.msra.mxu0 %v831
        %849 = vmatprep.subr.bf16.mxu0 0
        %850 = vmatpush2.bf16.msra.mxu0 0
        %851 = vmatprep.subr.bf16.mxu0 0
        %852 = vmatpush2.bf16.msra.mxu0 0
        %853 = vmatprep.subr.bf16.mxu0 0
        %854 = vmatpush2.bf16.msra.mxu0 0
        %855 = vmatprep.subr.bf16.mxu0 0
        %856 = vmatpush2.bf16.msra.mxu0 0
        %857 = vmatprep.subr.bf16.mxu0 0
        %858 = vmatpush2.bf16.msra.mxu0 0
        %859 = vmatprep.subr.bf16.mxu0 0
        %860 = vmatpush2.bf16.msra.mxu0 0
        %861 = vmatprep.subr.bf16.mxu0 0
        %862 = vmatpush2.bf16.msra.mxu0 0
        %863 = vmatprep.subr.bf16.mxu0 0
        %864 = vmatpush2.bf16.msra.mxu0 0
        %865 = vmatprep.mubr.bf16.mxu0 0
        %866 = vmatmul.mubr.bf16.gmra.mxu0 %v827
        %v867 = vpop.f32.mrf.mxu0
        %v868 = vadd.f32 0.0, %v867
        %v869 = vpop.f32.mrf.mxu0
        %v870 = vpop.f32.mrf.mxu0
        %v871 = vpop.f32.mrf.mxu0
        %872 = vdwg.mxu0
        %v874 = vsel %vm764, %v825, 0
        %v877 = vsel %vm829, %v675, 0
        %879 = vmatprep.subr.bf16.mxu0 0
        %880 = vmatpush1.bf16.msra.mxu0 0
        %881 = vmatprep.subr.bf16.mxu0 0
        %882 = vmatpush1.bf16.msra.mxu0 0
        %883 = vmatprep.subr.bf16.mxu0 0
        %884 = vmatpush1.bf16.msra.mxu0 0
        %885 = vmatprep.subr.bf16.mxu0 0
        %886 = vmatpush1.bf16.msra.mxu0 0
        %887 = vmatprep.subr.bf16.mxu0 0
        %888 = vmatpush1.bf16.msra.mxu0 0
        %889 = vmatprep.subr.bf16.mxu0 0
        %890 = vmatpush1.bf16.msra.mxu0 0
        %891 = vmatprep.subr.bf16.mxu0 0
        %892 = vmatpush1.bf16.msra.mxu0 0
        %893 = vmatprep.subr.bf16.mxu0 0
        %894 = vmatpush1.bf16.msra.mxu0 %v877
        %895 = vmatprep.subr.bf16.mxu0 0
        %896 = vmatpush2.bf16.msra.mxu0 0
        %897 = vmatprep.subr.bf16.mxu0 0
        %898 = vmatpush2.bf16.msra.mxu0 0
        %899 = vmatprep.subr.bf16.mxu0 0
        %900 = vmatpush2.bf16.msra.mxu0 0
        %901 = vmatprep.subr.bf16.mxu0 0
        %902 = vmatpush2.bf16.msra.mxu0 0
        %903 = vmatprep.subr.bf16.mxu0 0
        %904 = vmatpush2.bf16.msra.mxu0 0
        %905 = vmatprep.subr.bf16.mxu0 0
        %906 = vmatpush2.bf16.msra.mxu0 0
        %907 = vmatprep.subr.bf16.mxu0 0
        %908 = vmatpush2.bf16.msra.mxu0 0
        %909 = vmatprep.subr.bf16.mxu0 0
        %910 = vmatpush2.bf16.msra.mxu0 0
        %911 = vmatprep.mubr.bf16.mxu0 0
        %912 = vmatmul.mubr.bf16.gmra.mxu0 %v874
        %v913 = vpop.f32.mrf.mxu0
        %v914 = vadd.f32 0.0, %v913
        %v915 = vpop.f32.mrf.mxu0
        %v916 = vpop.f32.mrf.mxu0
        %v917 = vpop.f32.mrf.mxu0
        %918 = vdwg.mxu0
        %v919 = vadd.f32 %v822, %v868
        %v920 = vadd.f32 %v823, %v914
        %vm921 = vcmask 261120
        %922 = vst.msk [vmem:[#allocation5] sm:$0xff] %vm921, %v919
        %923 = vst.msk [vmem:[#allocation5 + $0x8] sm:$0xff] %vm921, %v920
        %924 = vst.msk [vmem:[#allocation3] sm:$0xff] %vm807, %v771
        %925 = vst.msk [vmem:[#allocation3 + $0x8] sm:$0xff] %vm807, %v772
        // Predicated region
        $region65: #{tpu_custom_call.1} parent=43 // pred_check
          %p926 = pneg %p361
        $region66: #{tpu_custom_call.1} parent=43 // pred_check_branch
          %928 = sbr.rel (%p926) target = $region68
        $region67: #{tpu_custom_call.1} parent=43 // pred_region
          %v929 = vld [vmem:[#allocation4] sm:$0xff]
          %v930 = vld [vmem:[#allocation4 + $0x8] sm:$0xff]
          %v931 = vrcp.pop %v929
          %v932 = vrcp.pop %v930
          %v933 = vld [vmem:[#allocation5] sm:$0xff]
          %v934 = vld [vmem:[#allocation5 + $0x8] sm:$0xff]
          %936 = vset.pattern.permute.xlu0 0
          %937 = vperm.xlu0 %936, %v931
          %v938 = vpop.permute.xlu0 %937
          %941 = vset.pattern.permute.xlu0 0
          %942 = vperm.xlu0 %941, %v932
          %v943 = vpop.permute.xlu0 %942
          %v945 = vmul.f32 %v933, %v938
          %v946 = vmul.f32 %v934, %v943
          %948 = vrot.lane.b32.xlu0 %v946, 32
          %v949 = vpop.permute.xlu0 %948
          %v951 = vsel %vm921, %v945, %v949
          %v952 = vld [vmem:[%s309] sm:$0xff]
          %v953 = vadd.f32 %v951, %v952
          %954 = vst.msk [vmem:[%s359] sm:$0xff] %vm583, %v953
        $region68: #{tpu_custom_call.1} parent=43 // pred_fallthru
          _
        %s955 = sand.u32 %s196, 1
        %s956 = scalar_lea.sflag [#allocation8], %s955
        %s957 = sand.u32 %s196, 1
        %s958 = smul.addr %s957, 8
        %s959 = scalar_lea.vmem [#allocation14], %s958
        // Predicated region
        $region69: #{tpu_custom_call.1} parent=43 // pred_check
          %p960 = pneg %p206
        $region70: #{tpu_custom_call.1} parent=43 // pred_check_branch
          %962 = sbr.rel (%p960) target = $region72
        $region71: #{tpu_custom_call.1} parent=43 // pred_region
          %s964 = ssub.s32 128, 128
          %965 = vsyncadd %s956, %s964
          %s966 = sadd.s32 %s33, %s32
          %s967 = smul.addr %s966, 128
          %s968 = scalar_lea.hbm %s6, %s967
          %s970 = sshll.u32 %s959, 4
          %s971 = int_to_ptr.vmem [resolvable:$true] %s970
          %973 = dma.vmem_to_hbm [thread:$0]  %s971, 128, %s968, %s956
        $region72: #{tpu_custom_call.1} parent=43 // pred_fallthru
          _
      $region44: #{tpu_custom_call.1} parent=5 // pred_fallthru
        _
      %p974 = scmp.le.s32.totalorder 2, %s22
      // Predicated region
      $region73: #{tpu_custom_call.1} parent=5 // pred_check
        %p975 = pneg %p974
      $region74: #{tpu_custom_call.1} parent=5 // pred_check_branch
        %977 = sbr.rel (%p975) target = $region76
      $region75: #{tpu_custom_call.1} parent=5 // pred_region
        %s978 = ssub.s32 %s22, 2
        // Predicated region
        $region77: #{tpu_custom_call.1} parent=75 // pred_check
          %p979 = pneg %p212
        $region78: #{tpu_custom_call.1} parent=75 // pred_check_branch
          %981 = sbr.rel (%p979) target = $region80
        $region79: #{tpu_custom_call.1} parent=75 // pred_region
          %s982 = sand.u32 %s197, 1
          %s983 = scalar_lea.sflag [#allocation8], %s982
          %s984 = sand.u32 %s197, 1
          %s985 = smul.addr %s984, 8
          %s986 = scalar_lea.vmem [#allocation14], %s985
          %987 = dma.done %s983, 128
        $region80: #{tpu_custom_call.1} parent=75 // pred_fallthru
          _
      $region76: #{tpu_custom_call.1} parent=5 // pred_fallthru
        _
    $region6: #{tpu_custom_call.1} parent=1 // loop_footer
      %s26 = sadd.s32 1, %s22
    $region7: #{tpu_custom_call.1} parent=1 // loop_footer_branch
      %21 = sbr.rel target = $region3
    $region8: #{tpu_custom_call.1} parent=1 // loop_exit
      _
    %988 = vsyncpa [#allocation7], 1
    %s989 = scalar_lea.sflag [#allocation7], 1
    %990 = vsyncpa %s989, 1
    %991 = vsyncpa [#allocation10], 1
    %s992 = scalar_lea.sflag [#allocation10], 1
    %993 = vsyncpa %s992, 1
    %994 = vsyncpa [#allocation13], 1
    %995 = vsyncpa [#allocation8], 1
    %s996 = scalar_lea.sflag [#allocation8], 1
    %997 = vsyncpa %s996, 1

</llo_original>
